<compile_context>
chip_gen: v5e
topology: v5e:2x2
jax: 0.10.0
libtpu: 0.0.40
codegen_flags: <defaults>
</compile_context>

<pallas_src>
import jax
import jax.numpy as jnp
from jax.experimental import pallas as pl
from jax.experimental.pallas import tpu as pltpu


def _identity_kernel(x_ref, o_ref):
    # Entire "compute" of StraightThrough: a full-tile pass-through store.
    o_ref[...] = x_ref[...]


def _sublane_multiple(dtype) -> int:
    # Minimum sublane tile: 8 rows for 4-byte dtypes, 16 for 2-byte, 32 for 1-byte.
    itemsize = jnp.dtype(dtype).itemsize
    return max(8, 32 // max(itemsize, 1))


def _choose_slab(shape, total: int) -> tuple[int, int]:
    """Pick (rows, cols) for a copy-free 2D view with a lane-dense last dim."""
    # Prefer the largest divisor of `total` that is a multiple of 128 (<= 8192).
    best = 0
    c = 128
    while c <= 8192:
        if total % c == 0:
            best = c
        c += 128
    if best:
        return total // best, best
    # Fallback: merge trailing dims until cols >= 128 (always divides total,
    # since cols is a product of trailing dims of the original shape).
    cols = 1
    for d in reversed(shape):
        cols *= int(d)
        if cols >= 128:
            break
    cols = max(cols, 1)
    return total // cols, cols


def _tuning_for_device() -> tuple[int, int]:
    """(target_block_bytes, vmem_limit_bytes) by TPU generation."""
    try:
        kind = jax.devices()[0].device_kind.lower()
    except Exception:  # pragma: no cover - defensive
        kind = ""
    if ("v6" in kind) or ("v7" in kind):
        # 2 arrays x 2 buffers x 8 MiB = 32 MiB + headroom; under v7x's 64 MiB VMEM.
        return 8 << 20, 40 << 20
    # v5e and unknown: 4 MiB blocks, raise the 16 MiB scoped default to 32 MiB.
    return 4 << 20, 32 << 20


def _straight_through_copy(x: jax.Array) -> jax.Array:
    """Tiled Pallas copy producing a fresh buffer (only if the caller needs one)."""
    orig_shape = x.shape
    dtype = x.dtype
    total = x.size
    itemsize = jnp.dtype(dtype).itemsize

    target_block_bytes, vmem_limit_bytes = _tuning_for_device()

    rows, cols = _choose_slab(orig_shape, total)
    x2d = x.reshape(rows, cols)  # pure reshape: no pad, no extra HBM pass

    # Row-block budget from the VMEM-padded footprint (lane padding to 128).
    padded_cols = ((cols + 127) // 128) * 128
    sub = _sublane_multiple(dtype)
    rows_budget = max(1, target_block_bytes // (padded_cols * itemsize))
    if rows_budget >= rows:
        tile_rows = rows  # full-extent block (exempt from divisibility rule)
    else:
        tile_rows = max(sub, (rows_budget // sub) * sub)
        tile_rows = min(tile_rows, rows)
    grid = (pl.cdiv(rows, tile_rows),)  # ragged last block handled by Pallas

    out2d = pl.pallas_call(
        _identity_kernel,
        out_shape=jax.ShapeDtypeStruct((rows, cols), dtype),
        grid_spec=pltpu.PrefetchScalarGridSpec(
            num_scalar_prefetch=0,
            grid=grid,
            in_specs=[pl.BlockSpec((tile_rows, cols), lambda i: (i, 0))],
            out_specs=pl.BlockSpec((tile_rows, cols), lambda i: (i, 0)),
        ),
        compiler_params=pltpu.CompilerParams(
            dimension_semantics=("parallel",),
            vmem_limit_bytes=vmem_limit_bytes,
        ),
        cost_estimate=pl.CostEstimate(
            flops=0, transcendentals=0, bytes_accessed=2 * total * itemsize
        ),
    )(x2d)

    return out2d.reshape(orig_shape)


def straight_through(x: jax.Array, *, copy: bool = False) -> jax.Array:
    """StraightThrough.forward: identity.

    Default path returns `x` unchanged (zero HBM traffic — the only change
    that alters the roofline for a pure identity).  Pass `copy=True` to get a
    fresh buffer produced by the tiled Pallas copy kernel.
    """
    if not copy or x.size == 0:
        return x
    return _straight_through_copy(x)


if __name__ == "__main__":
    key = jax.random.PRNGKey(0)
    # Shape implied by typical conv-activation usage: NCHW.
    x = jax.random.normal(key, (2, 4, 16, 16), dtype=jnp.float32)

    # Default path: bit-exact no-op, no data movement.
    y = straight_through(x)
    jax.block_until_ready(y)
    assert y.shape == x.shape and y.dtype == x.dtype
    assert bool(jnp.all(y == x))

    # Fresh-buffer path: exercises the Pallas copy kernel on TPU.
    y2 = straight_through(x, copy=True)
    jax.block_until_ready(y2)
    assert y2.shape == x.shape and y2.dtype == x.dtype
    assert bool(jnp.all(y2 == x))

    print("KERNEL_OK")
</pallas_src>

<mosaic_0001>
module attributes {stable_mosaic.version = 11 : i64} {
  func.func @_identity_kernel(%arg0: i32, %arg1: memref<1x2048xf32, #tpu.memory_space<vmem>>, %arg2: memref<1x2048xf32, #tpu.memory_space<vmem>>) attributes {dimension_semantics = [#tpu.dimension_semantics<parallel>], iteration_bounds = array<i64: 1>, scalar_prefetch = 0 : i64, scratch_operands = 0 : i64, tpu.core_type = #tpu.core_type<tc>, window_params = [{transform_indices = @transform_0, window_bounds = array<i64: 1, 2048>}, {transform_indices = @transform_1, window_bounds = array<i64: 1, 2048>}]} {
    %c0 = arith.constant 0 : index
    %c0_0 = arith.constant 0 : index
    %0 = vector.load %arg1[%c0, %c0_0] : memref<1x2048xf32, #tpu.memory_space<vmem>>, vector<1x2048xf32>
    %c0_1 = arith.constant 0 : index
    %c0_2 = arith.constant 0 : index
    %1 = vector.load %arg2[%c0_1, %c0_2] : memref<1x2048xf32, #tpu.memory_space<vmem>>, vector<1x2048xf32>
    tpu.vector_store %arg2[%c0_1, %c0_2], %0 {strides = array<i32>} : memref<1x2048xf32, #tpu.memory_space<vmem>>, vector<1x2048xf32>,
    return
  }
  func.func @transform_0(%arg0: i32) -> (i32, i32) {
    %c0_i32 = arith.constant 0 : i32
    %c0_i32_0 = arith.constant 0 : i32
    return %arg0, %c0_i32 : i32, i32
  }
  func.func @transform_1(%arg0: i32) -> (i32, i32) {
    %c0_i32 = arith.constant 0 : i32
    %c0_i32_0 = arith.constant 0 : i32
    return %arg0, %c0_i32 : i32, i32
  }
}

</mosaic_0001>

<llo_original>
// kernel: tpu_custom_call.1
$region0: #{tpu_custom_call.1}
  #allocation0 [shape = 'u32[]', space=smem, size = 0x4, offset = 0x4, fixed_abs, tag = 'smem constant byte address 0x4 - core index']
  #allocation1 [shape = 'u32[72,128]{1,0:T(1,128)}', space=vmem, size = 0x9000, scoped, tag = 'internal scratch']
  %s0 = inlined_call_operand.hbm [shape: f32[1,2048], index: 0, kind: input, shape index: {}]
  %s1 = inlined_call_operand.hbm [shape: f32[1,2048], index: 1, kind: output, shape index: {}]
  %s2 = sld [smem:[#allocation0]]
  $region18: #{tpu_custom_call.1} parent=0
    _
  %s4 = ssub.s32 1, %s2
  %s5 = scalar_select 0, %s4, %s2
  $region1: #{tpu_custom_call.1} parent=0
    #allocation2 [shape = 'u8[8192]{0}', space=vmem, size = 0x2000, scoped, tag = 'input window, operand 0, single buffered']
    #allocation3 [shape = 's32[1]{0}', space=sflag, size = 0x4, scoped, tag = 'scoped memory for tpu_custom_call.1']
    #allocation4 [shape = 's32[1]{0}', space=sflag, size = 0x4, scoped, tag = 'scoped memory for tpu_custom_call.1']
    #allocation5 [shape = 'u8[8192]{0}', space=vmem, size = 0x2000, scoped, tag = 'output window, operand 0, single buffered']
    %6 = vsyncpa [#allocation3], 0
    %7 = vsyncpa [#allocation4], 0
    // Predicated region
    $region2: #{tpu_custom_call.1} parent=1 // pred_check
      _
    $region3: #{tpu_custom_call.1} parent=1 // pred_check_branch
      %9 = sbr.rel (0) target = $region5
    $region4: #{tpu_custom_call.1} parent=1 // pred_region
      %11 = vsyncadd [#allocation3], 0
      %s13 = sshll.u32 %s0, 4
      %s14 = int_to_ptr.hbm [resolvable:$true] %s13
      %s15 = sshll.u32 [#allocation2], 4
      %s16 = int_to_ptr.vmem [resolvable:$true] %s15
      %18 = dma.hbm_to_vmem [thread:$0]  %s14, 256, %s16, [#allocation3]
    $region5: #{tpu_custom_call.1} parent=1 // pred_fallthru
      _
    // Predicated region
    $region6: #{tpu_custom_call.1} parent=1 // pred_check
      _
    $region7: #{tpu_custom_call.1} parent=1 // pred_check_branch
      %20 = sbr.rel (0) target = $region9
    $region8: #{tpu_custom_call.1} parent=1 // pred_region
      %22 = dma.done [#allocation3], 256
    $region9: #{tpu_custom_call.1} parent=1 // pred_fallthru
      _
    %v23 = vld [vmem:[#allocation2] sm:$0xff]
    %v24 = vld [vmem:[#allocation2 + $0x8] sm:$0xff]
    %25 = vst [vmem:[#allocation5] sm:$0xff] %v23
    %26 = vst [vmem:[#allocation5 + $0x8] sm:$0xff] %v24
    // Predicated region
    $region10: #{tpu_custom_call.1} parent=1 // pred_check
      _
    $region11: #{tpu_custom_call.1} parent=1 // pred_check_branch
      %28 = sbr.rel (0) target = $region13
    $region12: #{tpu_custom_call.1} parent=1 // pred_region
      %30 = vsyncadd [#allocation4], 0
      %s32 = sshll.u32 [#allocation5], 4
      %s33 = int_to_ptr.vmem [resolvable:$true] %s32
      %s34 = sshll.u32 %s1, 4
      %s35 = int_to_ptr.hbm [resolvable:$true] %s34
      %37 = dma.vmem_to_hbm [thread:$0]  %s33, 256, %s35, [#allocation4]
    $region13: #{tpu_custom_call.1} parent=1 // pred_fallthru
      _
    // Predicated region
    $region14: #{tpu_custom_call.1} parent=1 // pred_check
      _
    $region15: #{tpu_custom_call.1} parent=1 // pred_check_branch
      %39 = sbr.rel (0) target = $region17
    $region16: #{tpu_custom_call.1} parent=1 // pred_region
      %41 = dma.done [#allocation4], 256
    $region17: #{tpu_custom_call.1} parent=1 // pred_fallthru
      _
    %42 = vsyncpa [#allocation3], 1
    %43 = vsyncpa [#allocation4], 1

</llo_original>
